<compile_context>
chip_gen: v5e
topology: v5e:2x2
jax: 0.10.0
libtpu: 0.0.40
codegen_flags: <defaults>
</compile_context>

<pallas_src>
import jax
import jax.numpy as jnp
from jax.experimental import pallas as pl
from jax.experimental.pallas import tpu as pltpu

# ---- synthetic model config (mirrors the shapes implied by __init__) --------
VOCAB_DIAG = 32
VOCAB_PRESC = 32
VOCAB_YDELSE = 64
EMB_DIM = VOCAB_DIAG + VOCAB_PRESC + VOCAB_YDELSE    # sum(vocab_sizes) = 128
HIDDEN = 32
NUM_CLASSES = 2
OUT_PAD = 8                   # classes padded to 8 lanes (sliced back outside)
BATCH = 8
SEQ = 16
ROW_CHUNK = 64                # inner row chunk: bounds vreg pressure
N_ACC = 4                     # independent multi-hot OR accumulators


def bow_kernel(diag_ref, presc_ref, ydelse_ref, w1_ref, b1_ref, w2_ref, b2_ref,
               out_ref):
    tb = out_ref.shape[0]                      # static tile rows
    rb = min(ROW_CHUNK, tb)                    # inner chunk rows (tb % rb == 0)
    n_chunks = tb // rb

    # hoisted constant: vocab index per lane (live across the chunk loop)
    iota_v = jax.lax.broadcasted_iota(jnp.int32, (rb, EMB_DIM), 1)

    @pl.loop(0, n_chunks)
    def _(c):
        r = pl.multiple_of(c * rb, rb)
        rows = pl.ds(r, rb)
        # fold modality lane offsets into in-kernel adds (no wrapper concat)
        toks = (diag_ref[rows, :],
                presc_ref[rows, :] + VOCAB_DIAG,
                ydelse_ref[rows, :] + (VOCAB_DIAG + VOCAB_PRESC))

        # fused bag-of-words multi-hot: 4 independent OR accumulators so the
        # 48-token compare chain is 12 deep per accumulator, tree-combined.
        accs = [None] * N_ACC
        idx = 0
        for tok in toks:
            for j in range(tok.shape[1]):
                hit = tok[:, j:j + 1] == iota_v          # bool (rb, 128)
                k = idx % N_ACC
                accs[k] = hit if accs[k] is None else (accs[k] | hit)
                idx += 1
        acc = (accs[0] | accs[1]) | (accs[2] | accs[3])
        emb = acc.astype(jnp.bfloat16)                   # 0/1 exact in bf16

        # classifier: Linear -> ReLU -> Linear (bf16 MXU, f32 accumulation)
        h = jnp.dot(emb, w1_ref[...], preferred_element_type=jnp.float32)
        h = jnp.maximum(h + b1_ref[...], 0.0).astype(jnp.bfloat16)
        out = jnp.dot(h, w2_ref[...],
                      preferred_element_type=jnp.float32) + b2_ref[...]
        out_ref[rows, :] = out                           # (rb, 8) f32 store


def prepare_params(w1, b1, w2, b2):
    """One-time weight preprocessing, hoisted out of the forward path."""
    w1_bf = w1.astype(jnp.bfloat16)                              # (128, 32)
    b1_f = b1.astype(jnp.float32).reshape(1, HIDDEN)             # (1, 32)
    w2_bf = jnp.pad(w2.astype(jnp.bfloat16),
                    ((0, 0), (0, OUT_PAD - NUM_CLASSES)))        # (32, 8)
    b2_f = jnp.pad(b2.astype(jnp.float32).reshape(1, NUM_CLASSES),
                   ((0, 0), (0, OUT_PAD - NUM_CLASSES)))         # (1, 8)
    return w1_bf, b1_f, w2_bf, b2_f


def _choose_tiling(batch):
    """Returns (tile_rows, grid_steps).

    Small batches: one full-batch tile. Larger batches: tiles up to 1024 rows
    (multiples of ROW_CHUNK) with an EVEN number of grid steps so the
    'parallel' axis balances across v7x's two TensorCores."""
    if batch <= ROW_CHUNK:
        return batch, 1
    cap = 1024
    steps = max(2, -(-batch // cap))
    if steps % 2:
        steps += 1
    tile = -(-batch // steps)                      # ceil(batch / steps)
    tile = -(-tile // ROW_CHUNK) * ROW_CHUNK       # round up to chunk multiple
    return tile, steps


@jax.jit
def bag_of_words_forward(diag, presc, ydelse, w1_bf, b1_f, w2_bf, b2_f):
    B = diag.shape[0]
    TB, steps = _choose_tiling(B)
    Bp = TB * steps

    diag = diag.astype(jnp.int32)
    presc = presc.astype(jnp.int32)
    ydelse = ydelse.astype(jnp.int32)
    if Bp != B:                                    # pad batch to tile multiple
        pad = ((0, Bp - B), (0, 0))
        diag = jnp.pad(diag, pad)
        presc = jnp.pad(presc, pad)
        ydelse = jnp.pad(ydelse, pad)

    out_padded = pl.pallas_call(
        bow_kernel,
        out_shape=jax.ShapeDtypeStruct((Bp, OUT_PAD), jnp.float32),
        grid=(steps,),
        in_specs=[
            pl.BlockSpec((TB, SEQ), lambda i: (i, 0)),
            pl.BlockSpec((TB, SEQ), lambda i: (i, 0)),
            pl.BlockSpec((TB, SEQ), lambda i: (i, 0)),
            pl.BlockSpec((EMB_DIM, HIDDEN), lambda i: (0, 0)),   # resident W1
            pl.BlockSpec((1, HIDDEN), lambda i: (0, 0)),
            pl.BlockSpec((HIDDEN, OUT_PAD), lambda i: (0, 0)),   # resident W2
            pl.BlockSpec((1, OUT_PAD), lambda i: (0, 0)),
        ],
        out_specs=pl.BlockSpec((TB, OUT_PAD), lambda i: (i, 0)),
        compiler_params=pltpu.CompilerParams(
            dimension_semantics=("parallel",)),
    )(diag, presc, ydelse, w1_bf, b1_f, w2_bf, b2_f)

    return out_padded[:B, :NUM_CLASSES]


def reference(diag, presc, ydelse, w1, b1, w2, b2):
    def mh(tokens, vocab):
        hits = tokens[:, :, None] == jnp.arange(vocab)[None, None, :]
        return jnp.max(hits.astype(jnp.float32), axis=1)
    emb = jnp.concatenate(
        [mh(diag, VOCAB_DIAG), mh(presc, VOCAB_PRESC), mh(ydelse, VOCAB_YDELSE)],
        axis=1)
    h = jnp.maximum(emb @ w1 + b1, 0.0)
    return h @ w2 + b2


if __name__ == "__main__":
    key = jax.random.PRNGKey(0)
    kd, kp, ky, k1, k2, k3, k4 = jax.random.split(key, 7)

    # deterministic example inputs (tokens per modality) and parameters
    diag = jax.random.randint(kd, (BATCH, SEQ), 0, VOCAB_DIAG, dtype=jnp.int32)
    presc = jax.random.randint(kp, (BATCH, SEQ), 0, VOCAB_PRESC, dtype=jnp.int32)
    ydelse = jax.random.randint(ky, (BATCH, SEQ), 0, VOCAB_YDELSE,
                                dtype=jnp.int32)
    w1 = jax.random.normal(k1, (EMB_DIM, HIDDEN), jnp.float32) * 0.1
    b1 = jax.random.normal(k2, (1, HIDDEN), jnp.float32) * 0.1
    w2 = jax.random.normal(k3, (HIDDEN, NUM_CLASSES), jnp.float32) * 0.1
    b2 = jax.random.normal(k4, (1, NUM_CLASSES), jnp.float32) * 0.1

    params = prepare_params(w1, b1, w2, b2)      # one-time, outside forward
    out = bag_of_words_forward(diag, presc, ydelse, *params)
    out = jax.block_until_ready(out)

    ref = reference(diag, presc, ydelse, w1, b1, w2, b2)
    assert out.shape == (BATCH, NUM_CLASSES)
    assert jnp.allclose(out, ref, atol=1e-2, rtol=1e-2), (
        float(jnp.max(jnp.abs(out - ref))))
    print("KERNEL_OK")
</pallas_src>

<mosaic_0001>
module attributes {stable_mosaic.version = 11 : i64} {
  func.func @bow_kernel(%arg0: i32, %arg1: memref<8x16xi32, #tpu.memory_space<vmem>>, %arg2: memref<8x16xi32, #tpu.memory_space<vmem>>, %arg3: memref<8x16xi32, #tpu.memory_space<vmem>>, %arg4: memref<128x32xbf16, #tpu.memory_space<vmem>>, %arg5: memref<1x32xf32, #tpu.memory_space<vmem>>, %arg6: memref<32x8xbf16, #tpu.memory_space<vmem>>, %arg7: memref<1x8xf32, #tpu.memory_space<vmem>>, %arg8: memref<8x8xf32, #tpu.memory_space<vmem>>) attributes {dimension_semantics = [#tpu.dimension_semantics<parallel>], iteration_bounds = array<i64: 1>, scalar_prefetch = 0 : i64, scratch_operands = 0 : i64, tpu.core_type = #tpu.core_type<tc>, window_params = [{transform_indices = @transform_0, window_bounds = array<i64: 8, 16>}, {transform_indices = @transform_1, window_bounds = array<i64: 8, 16>}, {transform_indices = @transform_2, window_bounds = array<i64: 8, 16>}, {pipeline_mode = #tpu.pipeline_mode<synchronous>, transform_indices = @transform_3, window_bounds = array<i64: 128, 32>}, {pipeline_mode = #tpu.pipeline_mode<synchronous>, transform_indices = @transform_4, window_bounds = array<i64: 1, 32>}, {pipeline_mode = #tpu.pipeline_mode<synchronous>, transform_indices = @transform_5, window_bounds = array<i64: 32, 8>}, {pipeline_mode = #tpu.pipeline_mode<synchronous>, transform_indices = @transform_6, window_bounds = array<i64: 1, 8>}, {transform_indices = @transform_7, window_bounds = array<i64: 8, 8>}]} {
    %0 = tpu.iota {dimensions = array<i32: 1>} : vector<8x128xi32>
    %c0_i32 = arith.constant 0 : i32
    %c1_i32 = arith.constant 1 : i32
    %1 = arith.muli %c0_i32, %c1_i32 : i32
    %c0_i32_0 = arith.constant 0 : i32
    %2 = arith.addi %c0_i32_0, %1 : i32
    %c8_i32 = arith.constant 8 : i32
    %3 = arith.muli %2, %c8_i32 : i32
    %4 = tpu.assume_multiple %3, 8 : i32
    %5 = arith.index_cast %4 : i32 to index
    %c0 = arith.constant 0 : index
    %6 = vector.load %arg1[%5, %c0] : memref<8x16xi32, #tpu.memory_space<vmem>>, vector<8x16xi32>
    %7 = arith.index_cast %4 : i32 to index
    %c0_1 = arith.constant 0 : index
    %8 = vector.load %arg2[%7, %c0_1] : memref<8x16xi32, #tpu.memory_space<vmem>>, vector<8x16xi32>
    %c32_i32 = arith.constant 32 : i32
    %9 = vector.broadcast %c32_i32 : i32 to vector<8x16xi32>
    %10 = arith.addi %8, %9 : vector<8x16xi32>
    %11 = arith.index_cast %4 : i32 to index
    %c0_2 = arith.constant 0 : index
    %12 = vector.load %arg3[%11, %c0_2] : memref<8x16xi32, #tpu.memory_space<vmem>>, vector<8x16xi32>
    %c64_i32 = arith.constant 64 : i32
    %13 = vector.broadcast %c64_i32 : i32 to vector<8x16xi32>
    %14 = arith.addi %12, %13 : vector<8x16xi32>
    %15 = vector.extract_strided_slice %6 {offsets = [0, 0], sizes = [8, 1], strides = [1, 1]} : vector<8x16xi32> to vector<8x1xi32>
    %16 = vector.broadcast %15 : vector<8x1xi32> to vector<8x128xi32>
    %17 = arith.cmpi eq, %16, %0 : vector<8x128xi32>
    %18 = vector.extract_strided_slice %6 {offsets = [0, 1], sizes = [8, 1], strides = [1, 1]} : vector<8x16xi32> to vector<8x1xi32>
    %19 = vector.broadcast %18 : vector<8x1xi32> to vector<8x128xi32>
    %20 = arith.cmpi eq, %19, %0 : vector<8x128xi32>
    %21 = vector.extract_strided_slice %6 {offsets = [0, 2], sizes = [8, 1], strides = [1, 1]} : vector<8x16xi32> to vector<8x1xi32>
    %22 = vector.broadcast %21 : vector<8x1xi32> to vector<8x128xi32>
    %23 = arith.cmpi eq, %22, %0 : vector<8x128xi32>
    %24 = vector.extract_strided_slice %6 {offsets = [0, 3], sizes = [8, 1], strides = [1, 1]} : vector<8x16xi32> to vector<8x1xi32>
    %25 = vector.broadcast %24 : vector<8x1xi32> to vector<8x128xi32>
    %26 = arith.cmpi eq, %25, %0 : vector<8x128xi32>
    %27 = vector.extract_strided_slice %6 {offsets = [0, 4], sizes = [8, 1], strides = [1, 1]} : vector<8x16xi32> to vector<8x1xi32>
    %28 = vector.broadcast %27 : vector<8x1xi32> to vector<8x128xi32>
    %29 = arith.cmpi eq, %28, %0 : vector<8x128xi32>
    %30 = arith.ori %17, %29 : vector<8x128xi1>
    %31 = vector.extract_strided_slice %6 {offsets = [0, 5], sizes = [8, 1], strides = [1, 1]} : vector<8x16xi32> to vector<8x1xi32>
    %32 = vector.broadcast %31 : vector<8x1xi32> to vector<8x128xi32>
    %33 = arith.cmpi eq, %32, %0 : vector<8x128xi32>
    %34 = arith.ori %20, %33 : vector<8x128xi1>
    %35 = vector.extract_strided_slice %6 {offsets = [0, 6], sizes = [8, 1], strides = [1, 1]} : vector<8x16xi32> to vector<8x1xi32>
    %36 = vector.broadcast %35 : vector<8x1xi32> to vector<8x128xi32>
    %37 = arith.cmpi eq, %36, %0 : vector<8x128xi32>
    %38 = arith.ori %23, %37 : vector<8x128xi1>
    %39 = vector.extract_strided_slice %6 {offsets = [0, 7], sizes = [8, 1], strides = [1, 1]} : vector<8x16xi32> to vector<8x1xi32>
    %40 = vector.broadcast %39 : vector<8x1xi32> to vector<8x128xi32>
    %41 = arith.cmpi eq, %40, %0 : vector<8x128xi32>
    %42 = arith.ori %26, %41 : vector<8x128xi1>
    %43 = vector.extract_strided_slice %6 {offsets = [0, 8], sizes = [8, 1], strides = [1, 1]} : vector<8x16xi32> to vector<8x1xi32>
    %44 = vector.broadcast %43 : vector<8x1xi32> to vector<8x128xi32>
    %45 = arith.cmpi eq, %44, %0 : vector<8x128xi32>
    %46 = arith.ori %30, %45 : vector<8x128xi1>
    %47 = vector.extract_strided_slice %6 {offsets = [0, 9], sizes = [8, 1], strides = [1, 1]} : vector<8x16xi32> to vector<8x1xi32>
    %48 = vector.broadcast %47 : vector<8x1xi32> to vector<8x128xi32>
    %49 = arith.cmpi eq, %48, %0 : vector<8x128xi32>
    %50 = arith.ori %34, %49 : vector<8x128xi1>
    %51 = vector.extract_strided_slice %6 {offsets = [0, 10], sizes = [8, 1], strides = [1, 1]} : vector<8x16xi32> to vector<8x1xi32>
    %52 = vector.broadcast %51 : vector<8x1xi32> to vector<8x128xi32>
    %53 = arith.cmpi eq, %52, %0 : vector<8x128xi32>
    %54 = arith.ori %38, %53 : vector<8x128xi1>
    %55 = vector.extract_strided_slice %6 {offsets = [0, 11], sizes = [8, 1], strides = [1, 1]} : vector<8x16xi32> to vector<8x1xi32>
    %56 = vector.broadcast %55 : vector<8x1xi32> to vector<8x128xi32>
    %57 = arith.cmpi eq, %56, %0 : vector<8x128xi32>
    %58 = arith.ori %42, %57 : vector<8x128xi1>
    %59 = vector.extract_strided_slice %6 {offsets = [0, 12], sizes = [8, 1], strides = [1, 1]} : vector<8x16xi32> to vector<8x1xi32>
    %60 = vector.broadcast %59 : vector<8x1xi32> to vector<8x128xi32>
    %61 = arith.cmpi eq, %60, %0 : vector<8x128xi32>
    %62 = arith.ori %46, %61 : vector<8x128xi1>
    %63 = vector.extract_strided_slice %6 {offsets = [0, 13], sizes = [8, 1], strides = [1, 1]} : vector<8x16xi32> to vector<8x1xi32>
    %64 = vector.broadcast %63 : vector<8x1xi32> to vector<8x128xi32>
    %65 = arith.cmpi eq, %64, %0 : vector<8x128xi32>
    %66 = arith.ori %50, %65 : vector<8x128xi1>
    %67 = vector.extract_strided_slice %6 {offsets = [0, 14], sizes = [8, 1], strides = [1, 1]} : vector<8x16xi32> to vector<8x1xi32>
    %68 = vector.broadcast %67 : vector<8x1xi32> to vector<8x128xi32>
    %69 = arith.cmpi eq, %68, %0 : vector<8x128xi32>
    %70 = arith.ori %54, %69 : vector<8x128xi1>
    %71 = vector.extract_strided_slice %6 {offsets = [0, 15], sizes = [8, 1], strides = [1, 1]} : vector<8x16xi32> to vector<8x1xi32>
    %72 = vector.broadcast %71 : vector<8x1xi32> to vector<8x128xi32>
    %73 = arith.cmpi eq, %72, %0 : vector<8x128xi32>
    %74 = arith.ori %58, %73 : vector<8x128xi1>
    %75 = vector.extract_strided_slice %10 {offsets = [0, 0], sizes = [8, 1], strides = [1, 1]} : vector<8x16xi32> to vector<8x1xi32>
    %76 = vector.broadcast %75 : vector<8x1xi32> to vector<8x128xi32>
    %77 = arith.cmpi eq, %76, %0 : vector<8x128xi32>
    %78 = arith.ori %62, %77 : vector<8x128xi1>
    %79 = vector.extract_strided_slice %10 {offsets = [0, 1], sizes = [8, 1], strides = [1, 1]} : vector<8x16xi32> to vector<8x1xi32>
    %80 = vector.broadcast %79 : vector<8x1xi32> to vector<8x128xi32>
    %81 = arith.cmpi eq, %80, %0 : vector<8x128xi32>
    %82 = arith.ori %66, %81 : vector<8x128xi1>
    %83 = vector.extract_strided_slice %10 {offsets = [0, 2], sizes = [8, 1], strides = [1, 1]} : vector<8x16xi32> to vector<8x1xi32>
    %84 = vector.broadcast %83 : vector<8x1xi32> to vector<8x128xi32>
    %85 = arith.cmpi eq, %84, %0 : vector<8x128xi32>
    %86 = arith.ori %70, %85 : vector<8x128xi1>
    %87 = vector.extract_strided_slice %10 {offsets = [0, 3], sizes = [8, 1], strides = [1, 1]} : vector<8x16xi32> to vector<8x1xi32>
    %88 = vector.broadcast %87 : vector<8x1xi32> to vector<8x128xi32>
    %89 = arith.cmpi eq, %88, %0 : vector<8x128xi32>
    %90 = arith.ori %74, %89 : vector<8x128xi1>
    %91 = vector.extract_strided_slice %10 {offsets = [0, 4], sizes = [8, 1], strides = [1, 1]} : vector<8x16xi32> to vector<8x1xi32>
    %92 = vector.broadcast %91 : vector<8x1xi32> to vector<8x128xi32>
    %93 = arith.cmpi eq, %92, %0 : vector<8x128xi32>
    %94 = arith.ori %78, %93 : vector<8x128xi1>
    %95 = vector.extract_strided_slice %10 {offsets = [0, 5], sizes = [8, 1], strides = [1, 1]} : vector<8x16xi32> to vector<8x1xi32>
    %96 = vector.broadcast %95 : vector<8x1xi32> to vector<8x128xi32>
    %97 = arith.cmpi eq, %96, %0 : vector<8x128xi32>
    %98 = arith.ori %82, %97 : vector<8x128xi1>
    %99 = vector.extract_strided_slice %10 {offsets = [0, 6], sizes = [8, 1], strides = [1, 1]} : vector<8x16xi32> to vector<8x1xi32>
    %100 = vector.broadcast %99 : vector<8x1xi32> to vector<8x128xi32>
    %101 = arith.cmpi eq, %100, %0 : vector<8x128xi32>
    %102 = arith.ori %86, %101 : vector<8x128xi1>
    %103 = vector.extract_strided_slice %10 {offsets = [0, 7], sizes = [8, 1], strides = [1, 1]} : vector<8x16xi32> to vector<8x1xi32>
    %104 = vector.broadcast %103 : vector<8x1xi32> to vector<8x128xi32>
    %105 = arith.cmpi eq, %104, %0 : vector<8x128xi32>
    %106 = arith.ori %90, %105 : vector<8x128xi1>
    %107 = vector.extract_strided_slice %10 {offsets = [0, 8], sizes = [8, 1], strides = [1, 1]} : vector<8x16xi32> to vector<8x1xi32>
    %108 = vector.broadcast %107 : vector<8x1xi32> to vector<8x128xi32>
    %109 = arith.cmpi eq, %108, %0 : vector<8x128xi32>
    %110 = arith.ori %94, %109 : vector<8x128xi1>
    %111 = vector.extract_strided_slice %10 {offsets = [0, 9], sizes = [8, 1], strides = [1, 1]} : vector<8x16xi32> to vector<8x1xi32>
    %112 = vector.broadcast %111 : vector<8x1xi32> to vector<8x128xi32>
    %113 = arith.cmpi eq, %112, %0 : vector<8x128xi32>
    %114 = arith.ori %98, %113 : vector<8x128xi1>
    %115 = vector.extract_strided_slice %10 {offsets = [0, 10], sizes = [8, 1], strides = [1, 1]} : vector<8x16xi32> to vector<8x1xi32>
    %116 = vector.broadcast %115 : vector<8x1xi32> to vector<8x128xi32>
    %117 = arith.cmpi eq, %116, %0 : vector<8x128xi32>
    %118 = arith.ori %102, %117 : vector<8x128xi1>
    %119 = vector.extract_strided_slice %10 {offsets = [0, 11], sizes = [8, 1], strides = [1, 1]} : vector<8x16xi32> to vector<8x1xi32>
    %120 = vector.broadcast %119 : vector<8x1xi32> to vector<8x128xi32>
    %121 = arith.cmpi eq, %120, %0 : vector<8x128xi32>
    %122 = arith.ori %106, %121 : vector<8x128xi1>
    %123 = vector.extract_strided_slice %10 {offsets = [0, 12], sizes = [8, 1], strides = [1, 1]} : vector<8x16xi32> to vector<8x1xi32>
    %124 = vector.broadcast %123 : vector<8x1xi32> to vector<8x128xi32>
    %125 = arith.cmpi eq, %124, %0 : vector<8x128xi32>
    %126 = arith.ori %110, %125 : vector<8x128xi1>
    %127 = vector.extract_strided_slice %10 {offsets = [0, 13], sizes = [8, 1], strides = [1, 1]} : vector<8x16xi32> to vector<8x1xi32>
    %128 = vector.broadcast %127 : vector<8x1xi32> to vector<8x128xi32>
    %129 = arith.cmpi eq, %128, %0 : vector<8x128xi32>
    %130 = arith.ori %114, %129 : vector<8x128xi1>
    %131 = vector.extract_strided_slice %10 {offsets = [0, 14], sizes = [8, 1], strides = [1, 1]} : vector<8x16xi32> to vector<8x1xi32>
    %132 = vector.broadcast %131 : vector<8x1xi32> to vector<8x128xi32>
    %133 = arith.cmpi eq, %132, %0 : vector<8x128xi32>
    %134 = arith.ori %118, %133 : vector<8x128xi1>
    %135 = vector.extract_strided_slice %10 {offsets = [0, 15], sizes = [8, 1], strides = [1, 1]} : vector<8x16xi32> to vector<8x1xi32>
    %136 = vector.broadcast %135 : vector<8x1xi32> to vector<8x128xi32>
    %137 = arith.cmpi eq, %136, %0 : vector<8x128xi32>
    %138 = arith.ori %122, %137 : vector<8x128xi1>
    %139 = vector.extract_strided_slice %14 {offsets = [0, 0], sizes = [8, 1], strides = [1, 1]} : vector<8x16xi32> to vector<8x1xi32>
    %140 = vector.broadcast %139 : vector<8x1xi32> to vector<8x128xi32>
    %141 = arith.cmpi eq, %140, %0 : vector<8x128xi32>
    %142 = arith.ori %126, %141 : vector<8x128xi1>
    %143 = vector.extract_strided_slice %14 {offsets = [0, 1], sizes = [8, 1], strides = [1, 1]} : vector<8x16xi32> to vector<8x1xi32>
    %144 = vector.broadcast %143 : vector<8x1xi32> to vector<8x128xi32>
    %145 = arith.cmpi eq, %144, %0 : vector<8x128xi32>
    %146 = arith.ori %130, %145 : vector<8x128xi1>
    %147 = vector.extract_strided_slice %14 {offsets = [0, 2], sizes = [8, 1], strides = [1, 1]} : vector<8x16xi32> to vector<8x1xi32>
    %148 = vector.broadcast %147 : vector<8x1xi32> to vector<8x128xi32>
    %149 = arith.cmpi eq, %148, %0 : vector<8x128xi32>
    %150 = arith.ori %134, %149 : vector<8x128xi1>
    %151 = vector.extract_strided_slice %14 {offsets = [0, 3], sizes = [8, 1], strides = [1, 1]} : vector<8x16xi32> to vector<8x1xi32>
    %152 = vector.broadcast %151 : vector<8x1xi32> to vector<8x128xi32>
    %153 = arith.cmpi eq, %152, %0 : vector<8x128xi32>
    %154 = arith.ori %138, %153 : vector<8x128xi1>
    %155 = vector.extract_strided_slice %14 {offsets = [0, 4], sizes = [8, 1], strides = [1, 1]} : vector<8x16xi32> to vector<8x1xi32>
    %156 = vector.broadcast %155 : vector<8x1xi32> to vector<8x128xi32>
    %157 = arith.cmpi eq, %156, %0 : vector<8x128xi32>
    %158 = arith.ori %142, %157 : vector<8x128xi1>
    %159 = vector.extract_strided_slice %14 {offsets = [0, 5], sizes = [8, 1], strides = [1, 1]} : vector<8x16xi32> to vector<8x1xi32>
    %160 = vector.broadcast %159 : vector<8x1xi32> to vector<8x128xi32>
    %161 = arith.cmpi eq, %160, %0 : vector<8x128xi32>
    %162 = arith.ori %146, %161 : vector<8x128xi1>
    %163 = vector.extract_strided_slice %14 {offsets = [0, 6], sizes = [8, 1], strides = [1, 1]} : vector<8x16xi32> to vector<8x1xi32>
    %164 = vector.broadcast %163 : vector<8x1xi32> to vector<8x128xi32>
    %165 = arith.cmpi eq, %164, %0 : vector<8x128xi32>
    %166 = arith.ori %150, %165 : vector<8x128xi1>
    %167 = vector.extract_strided_slice %14 {offsets = [0, 7], sizes = [8, 1], strides = [1, 1]} : vector<8x16xi32> to vector<8x1xi32>
    %168 = vector.broadcast %167 : vector<8x1xi32> to vector<8x128xi32>
    %169 = arith.cmpi eq, %168, %0 : vector<8x128xi32>
    %170 = arith.ori %154, %169 : vector<8x128xi1>
    %171 = vector.extract_strided_slice %14 {offsets = [0, 8], sizes = [8, 1], strides = [1, 1]} : vector<8x16xi32> to vector<8x1xi32>
    %172 = vector.broadcast %171 : vector<8x1xi32> to vector<8x128xi32>
    %173 = arith.cmpi eq, %172, %0 : vector<8x128xi32>
    %174 = arith.ori %158, %173 : vector<8x128xi1>
    %175 = vector.extract_strided_slice %14 {offsets = [0, 9], sizes = [8, 1], strides = [1, 1]} : vector<8x16xi32> to vector<8x1xi32>
    %176 = vector.broadcast %175 : vector<8x1xi32> to vector<8x128xi32>
    %177 = arith.cmpi eq, %176, %0 : vector<8x128xi32>
    %178 = arith.ori %162, %177 : vector<8x128xi1>
    %179 = vector.extract_strided_slice %14 {offsets = [0, 10], sizes = [8, 1], strides = [1, 1]} : vector<8x16xi32> to vector<8x1xi32>
    %180 = vector.broadcast %179 : vector<8x1xi32> to vector<8x128xi32>
    %181 = arith.cmpi eq, %180, %0 : vector<8x128xi32>
    %182 = arith.ori %166, %181 : vector<8x128xi1>
    %183 = vector.extract_strided_slice %14 {offsets = [0, 11], sizes = [8, 1], strides = [1, 1]} : vector<8x16xi32> to vector<8x1xi32>
    %184 = vector.broadcast %183 : vector<8x1xi32> to vector<8x128xi32>
    %185 = arith.cmpi eq, %184, %0 : vector<8x128xi32>
    %186 = arith.ori %170, %185 : vector<8x128xi1>
    %187 = vector.extract_strided_slice %14 {offsets = [0, 12], sizes = [8, 1], strides = [1, 1]} : vector<8x16xi32> to vector<8x1xi32>
    %188 = vector.broadcast %187 : vector<8x1xi32> to vector<8x128xi32>
    %189 = arith.cmpi eq, %188, %0 : vector<8x128xi32>
    %190 = arith.ori %174, %189 : vector<8x128xi1>
    %191 = vector.extract_strided_slice %14 {offsets = [0, 13], sizes = [8, 1], strides = [1, 1]} : vector<8x16xi32> to vector<8x1xi32>
    %192 = vector.broadcast %191 : vector<8x1xi32> to vector<8x128xi32>
    %193 = arith.cmpi eq, %192, %0 : vector<8x128xi32>
    %194 = arith.ori %178, %193 : vector<8x128xi1>
    %195 = vector.extract_strided_slice %14 {offsets = [0, 14], sizes = [8, 1], strides = [1, 1]} : vector<8x16xi32> to vector<8x1xi32>
    %196 = vector.broadcast %195 : vector<8x1xi32> to vector<8x128xi32>
    %197 = arith.cmpi eq, %196, %0 : vector<8x128xi32>
    %198 = arith.ori %182, %197 : vector<8x128xi1>
    %199 = vector.extract_strided_slice %14 {offsets = [0, 15], sizes = [8, 1], strides = [1, 1]} : vector<8x16xi32> to vector<8x1xi32>
    %200 = vector.broadcast %199 : vector<8x1xi32> to vector<8x128xi32>
    %201 = arith.cmpi eq, %200, %0 : vector<8x128xi32>
    %202 = arith.ori %186, %201 : vector<8x128xi1>
    %203 = arith.ori %190, %194 : vector<8x128xi1>
    %204 = arith.ori %198, %202 : vector<8x128xi1>
    %205 = arith.ori %203, %204 : vector<8x128xi1>
    %206 = arith.extui %205 : vector<8x128xi1> to vector<8x128xi32>
    %207 = arith.sitofp %206 : vector<8x128xi32> to vector<8x128xf32>
    %208 = arith.truncf %207 : vector<8x128xf32> to vector<8x128xbf16>
    %c0_3 = arith.constant 0 : index
    %c0_4 = arith.constant 0 : index
    %209 = vector.load %arg4[%c0_3, %c0_4] : memref<128x32xbf16, #tpu.memory_space<vmem>>, vector<128x32xbf16>
    %cst = arith.constant dense<0.000000e+00> : vector<8x32xf32>
    %210 = tpu.matmul %208, %209, %cst {dimension_numbers = #tpu.dot_dimension_numbers<[1], [0], [0], [1], [0, 0, 1, 1], [], []>} : vector<8x128xbf16>, vector<128x32xbf16>, vector<8x32xf32> -> vector<8x32xf32>
    %c0_5 = arith.constant 0 : index
    %c0_6 = arith.constant 0 : index
    %211 = vector.load %arg5[%c0_5, %c0_6] : memref<1x32xf32, #tpu.memory_space<vmem>>, vector<1x32xf32>
    %212 = vector.broadcast %211 : vector<1x32xf32> to vector<8x32xf32>
    %213 = arith.addf %210, %212 : vector<8x32xf32>
    %cst_7 = arith.constant 0.000000e+00 : f32
    %214 = vector.broadcast %cst_7 : f32 to vector<8x32xf32>
    %215 = arith.maximumf %213, %214 : vector<8x32xf32>
    %216 = arith.truncf %215 : vector<8x32xf32> to vector<8x32xbf16>
    %c0_8 = arith.constant 0 : index
    %c0_9 = arith.constant 0 : index
    %217 = vector.load %arg6[%c0_8, %c0_9] : memref<32x8xbf16, #tpu.memory_space<vmem>>, vector<32x8xbf16>
    %cst_10 = arith.constant dense<0.000000e+00> : vector<8x8xf32>
    %218 = tpu.matmul %216, %217, %cst_10 {dimension_numbers = #tpu.dot_dimension_numbers<[1], [0], [0], [1], [0, 0, 1, 1], [], []>} : vector<8x32xbf16>, vector<32x8xbf16>, vector<8x8xf32> -> vector<8x8xf32>
    %c0_11 = arith.constant 0 : index
    %c0_12 = arith.constant 0 : index
    %219 = vector.load %arg7[%c0_11, %c0_12] : memref<1x8xf32, #tpu.memory_space<vmem>>, vector<1x8xf32>
    %220 = vector.broadcast %219 : vector<1x8xf32> to vector<8x8xf32>
    %221 = arith.addf %218, %220 : vector<8x8xf32>
    %222 = arith.index_cast %4 : i32 to index
    %c0_13 = arith.constant 0 : index
    %223 = vector.load %arg8[%222, %c0_13] : memref<8x8xf32, #tpu.memory_space<vmem>>, vector<8x8xf32>
    tpu.vector_store %arg8[%222, %c0_13], %221 {strides = array<i32>} : memref<8x8xf32, #tpu.memory_space<vmem>>, vector<8x8xf32>,
    %c1_i32_14 = arith.constant 1 : i32
    return
  }
  func.func @transform_0(%arg0: i32) -> (i32, i32) {
    %c0_i32 = arith.constant 0 : i32
    %c0_i32_0 = arith.constant 0 : i32
    return %arg0, %c0_i32 : i32, i32
  }
  func.func @transform_1(%arg0: i32) -> (i32, i32) {
    %c0_i32 = arith.constant 0 : i32
    %c0_i32_0 = arith.constant 0 : i32
    return %arg0, %c0_i32 : i32, i32
  }
  func.func @transform_2(%arg0: i32) -> (i32, i32) {
    %c0_i32 = arith.constant 0 : i32
    %c0_i32_0 = arith.constant 0 : i32
    return %arg0, %c0_i32 : i32, i32
  }
  func.func @transform_3(%arg0: i32) -> (i32, i32) {
    %c0_i32 = arith.constant 0 : i32
    %c0_i32_0 = arith.constant 0 : i32
    %c0_i32_1 = arith.constant 0 : i32
    return %c0_i32, %c0_i32_0 : i32, i32
  }
  func.func @transform_4(%arg0: i32) -> (i32, i32) {
    %c0_i32 = arith.constant 0 : i32
    %c0_i32_0 = arith.constant 0 : i32
    %c0_i32_1 = arith.constant 0 : i32
    return %c0_i32, %c0_i32_0 : i32, i32
  }
  func.func @transform_5(%arg0: i32) -> (i32, i32) {
    %c0_i32 = arith.constant 0 : i32
    %c0_i32_0 = arith.constant 0 : i32
    %c0_i32_1 = arith.constant 0 : i32
    return %c0_i32, %c0_i32_0 : i32, i32
  }
  func.func @transform_6(%arg0: i32) -> (i32, i32) {
    %c0_i32 = arith.constant 0 : i32
    %c0_i32_0 = arith.constant 0 : i32
    %c0_i32_1 = arith.constant 0 : i32
    return %c0_i32, %c0_i32_0 : i32, i32
  }
  func.func @transform_7(%arg0: i32) -> (i32, i32) {
    %c0_i32 = arith.constant 0 : i32
    %c0_i32_0 = arith.constant 0 : i32
    return %arg0, %c0_i32 : i32, i32
  }
}

</mosaic_0001>

<llo_original>
// kernel: bag_of_words_forward.1
$region0: #{bag_of_words_forward.1}
  #allocation0 [shape = 'u32[]', space=smem, size = 0x4, offset = 0x4, fixed_abs, tag = 'smem constant byte address 0x4 - core index']
  #allocation1 [shape = 'u32[72,128]{1,0:T(1,128)}', space=vmem, size = 0x9000, scoped, tag = 'internal scratch']
  %s0 = inlined_call_operand.vmem [shape: s32[8,16], index: 0, kind: input, shape index: {}]
  %s1 = inlined_call_operand.vmem [shape: s32[8,16], index: 1, kind: input, shape index: {}]
  %s2 = inlined_call_operand.vmem [shape: s32[8,16], index: 2, kind: input, shape index: {}]
  %s3 = inlined_call_operand.vmem [shape: bf16[128,32], index: 3, kind: input, shape index: {}]
  %s4 = inlined_call_operand.vmem [shape: f32[1,32], index: 4, kind: input, shape index: {}]
  %s5 = inlined_call_operand.vmem [shape: bf16[32,8], index: 5, kind: input, shape index: {}]
  %s6 = inlined_call_operand.vmem [shape: f32[1,8], index: 6, kind: input, shape index: {}]
  %s7 = inlined_call_operand.vmem [shape: f32[8,8], index: 7, kind: output, shape index: {}]
  %s8 = sld [smem:[#allocation0]]
  $region38: #{bag_of_words_forward.1} parent=0
    _
  %s10 = ssub.s32 1, %s8
  %s11 = scalar_select 0, %s10, %s8
  // Predicated region
  $region2: #{bag_of_words_forward.1} parent=0 // pred_check
    _
  $region3: #{bag_of_words_forward.1} parent=0 // pred_check_branch
    %13 = sbr.rel (0) target = $region5
  $region4: #{bag_of_words_forward.1} parent=0 // pred_region
    _
  $region5: #{bag_of_words_forward.1} parent=0 // pred_fallthru
    _
  // Predicated region
  $region6: #{bag_of_words_forward.1} parent=0 // pred_check
    _
  $region7: #{bag_of_words_forward.1} parent=0 // pred_check_branch
    %15 = sbr.rel (0) target = $region9
  $region8: #{bag_of_words_forward.1} parent=0 // pred_region
    _
  $region9: #{bag_of_words_forward.1} parent=0 // pred_fallthru
    _
  // Predicated region
  $region10: #{bag_of_words_forward.1} parent=0 // pred_check
    _
  $region11: #{bag_of_words_forward.1} parent=0 // pred_check_branch
    %17 = sbr.rel (0) target = $region13
  $region12: #{bag_of_words_forward.1} parent=0 // pred_region
    _
  $region13: #{bag_of_words_forward.1} parent=0 // pred_fallthru
    _
  // Predicated region
  $region14: #{bag_of_words_forward.1} parent=0 // pred_check
    _
  $region15: #{bag_of_words_forward.1} parent=0 // pred_check_branch
    %19 = sbr.rel (0) target = $region17
  $region16: #{bag_of_words_forward.1} parent=0 // pred_region
    _
  $region17: #{bag_of_words_forward.1} parent=0 // pred_fallthru
    _
  // Predicated region
  $region18: #{bag_of_words_forward.1} parent=0 // pred_check
    _
  $region19: #{bag_of_words_forward.1} parent=0 // pred_check_branch
    %21 = sbr.rel (0) target = $region21
  $region20: #{bag_of_words_forward.1} parent=0 // pred_region
    _
  $region21: #{bag_of_words_forward.1} parent=0 // pred_fallthru
    _
  // Predicated region
  $region22: #{bag_of_words_forward.1} parent=0 // pred_check
    _
  $region23: #{bag_of_words_forward.1} parent=0 // pred_check_branch
    %23 = sbr.rel (0) target = $region25
  $region24: #{bag_of_words_forward.1} parent=0 // pred_region
    _
  $region25: #{bag_of_words_forward.1} parent=0 // pred_fallthru
    _
  // Predicated region
  $region26: #{bag_of_words_forward.1} parent=0 // pred_check
    _
  $region27: #{bag_of_words_forward.1} parent=0 // pred_check_branch
    %25 = sbr.rel (0) target = $region29
  $region28: #{bag_of_words_forward.1} parent=0 // pred_region
    _
  $region29: #{bag_of_words_forward.1} parent=0 // pred_fallthru
    _
  %v27 = vlaneseq
  %v28 = vand.u32 %v27, 127
  %v29 = vld [vmem:[%s0] sm:$0xff]
  %v30 = vld [vmem:[%s1] sm:$0xff]
  %v31 = vadd.s32 %v30, 32
  %v32 = vld [vmem:[%s2] sm:$0xff]
  %v33 = vadd.s32 %v32, 64
  %34 = vset.pattern.permute.xlu0 0
  %35 = vperm.xlu0 %34, %v29
  %v36 = vpop.permute.xlu0 %35
  %vm37 = vcmp.eq.s32.totalorder %v36, %v28
  %38 = vset.pattern.permute.xlu0 1
  %39 = vperm.xlu0 %38, %v29
  %v40 = vpop.permute.xlu0 %39
  %vm41 = vcmp.eq.s32.totalorder %v40, %v28
  %42 = vset.pattern.permute.xlu0 2
  %43 = vperm.xlu0 %42, %v29
  %v44 = vpop.permute.xlu0 %43
  %vm45 = vcmp.eq.s32.totalorder %v44, %v28
  %46 = vset.pattern.permute.xlu0 3
  %47 = vperm.xlu0 %46, %v29
  %v48 = vpop.permute.xlu0 %47
  %vm49 = vcmp.eq.s32.totalorder %v48, %v28
  %50 = vset.pattern.permute.xlu0 4
  %51 = vperm.xlu0 %50, %v29
  %v52 = vpop.permute.xlu0 %51
  %vm53 = vcmp.eq.s32.totalorder %v52, %v28
  %vm54 = vmor %vm37, %vm53
  %55 = vset.pattern.permute.xlu0 5
  %56 = vperm.xlu0 %55, %v29
  %v57 = vpop.permute.xlu0 %56
  %vm58 = vcmp.eq.s32.totalorder %v57, %v28
  %vm59 = vmor %vm41, %vm58
  %60 = vset.pattern.permute.xlu0 6
  %61 = vperm.xlu0 %60, %v29
  %v62 = vpop.permute.xlu0 %61
  %vm63 = vcmp.eq.s32.totalorder %v62, %v28
  %vm64 = vmor %vm45, %vm63
  %65 = vset.pattern.permute.xlu0 7
  %66 = vperm.xlu0 %65, %v29
  %v67 = vpop.permute.xlu0 %66
  %vm68 = vcmp.eq.s32.totalorder %v67, %v28
  %vm69 = vmor %vm49, %vm68
  %70 = vset.pattern.permute.xlu0 8
  %71 = vperm.xlu0 %70, %v29
  %v72 = vpop.permute.xlu0 %71
  %vm73 = vcmp.eq.s32.totalorder %v72, %v28
  %vm74 = vmor %vm54, %vm73
  %75 = vset.pattern.permute.xlu0 9
  %76 = vperm.xlu0 %75, %v29
  %v77 = vpop.permute.xlu0 %76
  %vm78 = vcmp.eq.s32.totalorder %v77, %v28
  %vm79 = vmor %vm59, %vm78
  %80 = vset.pattern.permute.xlu0 10
  %81 = vperm.xlu0 %80, %v29
  %v82 = vpop.permute.xlu0 %81
  %vm83 = vcmp.eq.s32.totalorder %v82, %v28
  %vm84 = vmor %vm64, %vm83
  %85 = vset.pattern.permute.xlu0 11
  %86 = vperm.xlu0 %85, %v29
  %v87 = vpop.permute.xlu0 %86
  %vm88 = vcmp.eq.s32.totalorder %v87, %v28
  %vm89 = vmor %vm69, %vm88
  %90 = vset.pattern.permute.xlu0 12
  %91 = vperm.xlu0 %90, %v29
  %v92 = vpop.permute.xlu0 %91
  %vm93 = vcmp.eq.s32.totalorder %v92, %v28
  %vm94 = vmor %vm74, %vm93
  %95 = vset.pattern.permute.xlu0 13
  %96 = vperm.xlu0 %95, %v29
  %v97 = vpop.permute.xlu0 %96
  %vm98 = vcmp.eq.s32.totalorder %v97, %v28
  %vm99 = vmor %vm79, %vm98
  %100 = vset.pattern.permute.xlu0 14
  %101 = vperm.xlu0 %100, %v29
  %v102 = vpop.permute.xlu0 %101
  %vm103 = vcmp.eq.s32.totalorder %v102, %v28
  %vm104 = vmor %vm84, %vm103
  %105 = vset.pattern.permute.xlu0 15
  %106 = vperm.xlu0 %105, %v29
  %v107 = vpop.permute.xlu0 %106
  %vm108 = vcmp.eq.s32.totalorder %v107, %v28
  %vm109 = vmor %vm89, %vm108
  %110 = vset.pattern.permute.xlu0 0
  %111 = vperm.xlu0 %110, %v31
  %v112 = vpop.permute.xlu0 %111
  %vm113 = vcmp.eq.s32.totalorder %v112, %v28
  %vm114 = vmor %vm94, %vm113
  %115 = vset.pattern.permute.xlu0 1
  %116 = vperm.xlu0 %115, %v31
  %v117 = vpop.permute.xlu0 %116
  %vm118 = vcmp.eq.s32.totalorder %v117, %v28
  %vm119 = vmor %vm99, %vm118
  %120 = vset.pattern.permute.xlu0 2
  %121 = vperm.xlu0 %120, %v31
  %v122 = vpop.permute.xlu0 %121
  %vm123 = vcmp.eq.s32.totalorder %v122, %v28
  %vm124 = vmor %vm104, %vm123
  %125 = vset.pattern.permute.xlu0 3
  %126 = vperm.xlu0 %125, %v31
  %v127 = vpop.permute.xlu0 %126
  %vm128 = vcmp.eq.s32.totalorder %v127, %v28
  %vm129 = vmor %vm109, %vm128
  %130 = vset.pattern.permute.xlu0 4
  %131 = vperm.xlu0 %130, %v31
  %v132 = vpop.permute.xlu0 %131
  %vm133 = vcmp.eq.s32.totalorder %v132, %v28
  %vm134 = vmor %vm114, %vm133
  %135 = vset.pattern.permute.xlu0 5
  %136 = vperm.xlu0 %135, %v31
  %v137 = vpop.permute.xlu0 %136
  %vm138 = vcmp.eq.s32.totalorder %v137, %v28
  %vm139 = vmor %vm119, %vm138
  %140 = vset.pattern.permute.xlu0 6
  %141 = vperm.xlu0 %140, %v31
  %v142 = vpop.permute.xlu0 %141
  %vm143 = vcmp.eq.s32.totalorder %v142, %v28
  %vm144 = vmor %vm124, %vm143
  %145 = vset.pattern.permute.xlu0 7
  %146 = vperm.xlu0 %145, %v31
  %v147 = vpop.permute.xlu0 %146
  %vm148 = vcmp.eq.s32.totalorder %v147, %v28
  %vm149 = vmor %vm129, %vm148
  %150 = vset.pattern.permute.xlu0 8
  %151 = vperm.xlu0 %150, %v31
  %v152 = vpop.permute.xlu0 %151
  %vm153 = vcmp.eq.s32.totalorder %v152, %v28
  %vm154 = vmor %vm134, %vm153
  %155 = vset.pattern.permute.xlu0 9
  %156 = vperm.xlu0 %155, %v31
  %v157 = vpop.permute.xlu0 %156
  %vm158 = vcmp.eq.s32.totalorder %v157, %v28
  %vm159 = vmor %vm139, %vm158
  %160 = vset.pattern.permute.xlu0 10
  %161 = vperm.xlu0 %160, %v31
  %v162 = vpop.permute.xlu0 %161
  %vm163 = vcmp.eq.s32.totalorder %v162, %v28
  %vm164 = vmor %vm144, %vm163
  %165 = vset.pattern.permute.xlu0 11
  %166 = vperm.xlu0 %165, %v31
  %v167 = vpop.permute.xlu0 %166
  %vm168 = vcmp.eq.s32.totalorder %v167, %v28
  %vm169 = vmor %vm149, %vm168
  %170 = vset.pattern.permute.xlu0 12
  %171 = vperm.xlu0 %170, %v31
  %v172 = vpop.permute.xlu0 %171
  %vm173 = vcmp.eq.s32.totalorder %v172, %v28
  %vm174 = vmor %vm154, %vm173
  %175 = vset.pattern.permute.xlu0 13
  %176 = vperm.xlu0 %175, %v31
  %v177 = vpop.permute.xlu0 %176
  %vm178 = vcmp.eq.s32.totalorder %v177, %v28
  %vm179 = vmor %vm159, %vm178
  %180 = vset.pattern.permute.xlu0 14
  %181 = vperm.xlu0 %180, %v31
  %v182 = vpop.permute.xlu0 %181
  %vm183 = vcmp.eq.s32.totalorder %v182, %v28
  %vm184 = vmor %vm164, %vm183
  %185 = vset.pattern.permute.xlu0 15
  %186 = vperm.xlu0 %185, %v31
  %v187 = vpop.permute.xlu0 %186
  %vm188 = vcmp.eq.s32.totalorder %v187, %v28
  %vm189 = vmor %vm169, %vm188
  %190 = vset.pattern.permute.xlu0 0
  %191 = vperm.xlu0 %190, %v33
  %v192 = vpop.permute.xlu0 %191
  %vm193 = vcmp.eq.s32.totalorder %v192, %v28
  %vm194 = vmor %vm174, %vm193
  %195 = vset.pattern.permute.xlu0 1
  %196 = vperm.xlu0 %195, %v33
  %v197 = vpop.permute.xlu0 %196
  %vm198 = vcmp.eq.s32.totalorder %v197, %v28
  %vm199 = vmor %vm179, %vm198
  %200 = vset.pattern.permute.xlu0 2
  %201 = vperm.xlu0 %200, %v33
  %v202 = vpop.permute.xlu0 %201
  %vm203 = vcmp.eq.s32.totalorder %v202, %v28
  %vm204 = vmor %vm184, %vm203
  %205 = vset.pattern.permute.xlu0 3
  %206 = vperm.xlu0 %205, %v33
  %v207 = vpop.permute.xlu0 %206
  %vm208 = vcmp.eq.s32.totalorder %v207, %v28
  %vm209 = vmor %vm189, %vm208
  %210 = vset.pattern.permute.xlu0 4
  %211 = vperm.xlu0 %210, %v33
  %v212 = vpop.permute.xlu0 %211
  %vm213 = vcmp.eq.s32.totalorder %v212, %v28
  %vm214 = vmor %vm194, %vm213
  %215 = vset.pattern.permute.xlu0 5
  %216 = vperm.xlu0 %215, %v33
  %v217 = vpop.permute.xlu0 %216
  %vm218 = vcmp.eq.s32.totalorder %v217, %v28
  %vm219 = vmor %vm199, %vm218
  %220 = vset.pattern.permute.xlu0 6
  %221 = vperm.xlu0 %220, %v33
  %v222 = vpop.permute.xlu0 %221
  %vm223 = vcmp.eq.s32.totalorder %v222, %v28
  %vm224 = vmor %vm204, %vm223
  %225 = vset.pattern.permute.xlu0 7
  %226 = vperm.xlu0 %225, %v33
  %v227 = vpop.permute.xlu0 %226
  %vm228 = vcmp.eq.s32.totalorder %v227, %v28
  %vm229 = vmor %vm209, %vm228
  %230 = vset.pattern.permute.xlu0 8
  %231 = vperm.xlu0 %230, %v33
  %v232 = vpop.permute.xlu0 %231
  %vm233 = vcmp.eq.s32.totalorder %v232, %v28
  %vm234 = vmor %vm214, %vm233
  %235 = vset.pattern.permute.xlu0 9
  %236 = vperm.xlu0 %235, %v33
  %v237 = vpop.permute.xlu0 %236
  %vm238 = vcmp.eq.s32.totalorder %v237, %v28
  %vm239 = vmor %vm219, %vm238
  %240 = vset.pattern.permute.xlu0 10
  %241 = vperm.xlu0 %240, %v33
  %v242 = vpop.permute.xlu0 %241
  %vm243 = vcmp.eq.s32.totalorder %v242, %v28
  %vm244 = vmor %vm224, %vm243
  %245 = vset.pattern.permute.xlu0 11
  %246 = vperm.xlu0 %245, %v33
  %v247 = vpop.permute.xlu0 %246
  %vm248 = vcmp.eq.s32.totalorder %v247, %v28
  %vm249 = vmor %vm229, %vm248
  %250 = vset.pattern.permute.xlu0 12
  %251 = vperm.xlu0 %250, %v33
  %v252 = vpop.permute.xlu0 %251
  %vm253 = vcmp.eq.s32.totalorder %v252, %v28
  %vm254 = vmor %vm234, %vm253
  %255 = vset.pattern.permute.xlu0 13
  %256 = vperm.xlu0 %255, %v33
  %v257 = vpop.permute.xlu0 %256
  %vm258 = vcmp.eq.s32.totalorder %v257, %v28
  %vm259 = vmor %vm239, %vm258
  %260 = vset.pattern.permute.xlu0 14
  %261 = vperm.xlu0 %260, %v33
  %v262 = vpop.permute.xlu0 %261
  %vm263 = vcmp.eq.s32.totalorder %v262, %v28
  %vm264 = vmor %vm244, %vm263
  %265 = vset.pattern.permute.xlu0 15
  %266 = vperm.xlu0 %265, %v33
  %v267 = vpop.permute.xlu0 %266
  %vm268 = vcmp.eq.s32.totalorder %v267, %v28
  %vm269 = vmor %vm249, %vm268
  %vm270 = vmor %vm254, %vm259
  %vm271 = vmor %vm264, %vm269
  %vm272 = vmor %vm270, %vm271
  %v273 = vsel %vm272, 1, 0
  %v274 = vcvt.s32.f32 %v273
  %v275 = vpack.c.bf16 %v274, %v274
  %v276 = vld [vmem:[%s3] sm:$0xf]
  %v277 = vld [vmem:[%s3 + $0x4] sm:$0xf]
  %v278 = vld [vmem:[%s3 + $0x8] sm:$0xf]
  %v279 = vld [vmem:[%s3 + $0xc] sm:$0xf]
  %v280 = vld [vmem:[%s3 + $0x10] sm:$0xf]
  %v281 = vld [vmem:[%s3 + $0x14] sm:$0xf]
  %v282 = vld [vmem:[%s3 + $0x18] sm:$0xf]
  %v283 = vld [vmem:[%s3 + $0x1c] sm:$0xf]
  %v284 = vld [vmem:[%s3 + $0x20] sm:$0xf]
  %v285 = vld [vmem:[%s3 + $0x24] sm:$0xf]
  %v286 = vld [vmem:[%s3 + $0x28] sm:$0xf]
  %v287 = vld [vmem:[%s3 + $0x2c] sm:$0xf]
  %v288 = vld [vmem:[%s3 + $0x30] sm:$0xf]
  %v289 = vld [vmem:[%s3 + $0x34] sm:$0xf]
  %v290 = vld [vmem:[%s3 + $0x38] sm:$0xf]
  %v291 = vld [vmem:[%s3 + $0x3c] sm:$0xf]
  %v292 = vld [vmem:[%s4] sm:$0x1]
  %v294 = vperm.slane %v292, 0
  %v312 = vunpack.c.l.b16 %v276
  %v313 = vunpack.c.l.b16 %v277
  %v314 = vunpack.c.l.b16 %v278
  %v315 = vunpack.c.l.b16 %v279
  %v316 = vunpack.c.l.b16 %v280
  %v317 = vunpack.c.l.b16 %v281
  %v318 = vunpack.c.l.b16 %v282
  %v319 = vunpack.c.l.b16 %v283
  %v320 = vunpack.c.l.b16 %v284
  %v321 = vunpack.c.l.b16 %v285
  %v322 = vunpack.c.l.b16 %v286
  %v323 = vunpack.c.l.b16 %v287
  %v324 = vunpack.c.l.b16 %v288
  %v325 = vunpack.c.l.b16 %v289
  %v326 = vunpack.c.l.b16 %v290
  %v327 = vunpack.c.l.b16 %v291
  %v328 = vpack.c.b16 %v313, %v312
  %v329 = vpack.c.b16 %v315, %v314
  %v330 = vpack.c.b16 %v317, %v316
  %v331 = vpack.c.b16 %v319, %v318
  %v332 = vpack.c.b16 %v321, %v320
  %v333 = vpack.c.b16 %v323, %v322
  %v334 = vpack.c.b16 %v325, %v324
  %v335 = vpack.c.b16 %v327, %v326
  %344 = vmatpush.bf16.msra.mxu0 %v335
  %345 = vmatpush.bf16.msra.mxu0 %v334
  %346 = vmatpush.bf16.msra.mxu0 %v333
  %347 = vmatpush.bf16.msra.mxu0 %v332
  %348 = vmatpush.bf16.msra.mxu0 %v331
  %349 = vmatpush.bf16.msra.mxu0 %v330
  %350 = vmatpush.bf16.msra.mxu0 %v329
  %351 = vmatpush.bf16.msra.mxu0 %v328
  %352 = vmatmul.bf16.gmra.mxu0 %v275
  %v353 = vpop.f32.mrf.mxu0
  %v354 = vadd.f32 %v294, %v353
  %v355 = vpop.f32.mrf.mxu0
  %356 = vdwg.mxu0
  %v357 = vmax.f32 %v354, 0.0
  %v358 = vpack.c.bf16 %v357, %v357
  %v359 = vld [vmem:[%s5] sm:$0xf]
  %v360 = vld [vmem:[%s5 + $0x4] sm:$0xf]
  %v361 = vld [vmem:[%s5 + $0x8] sm:$0xf]
  %v362 = vld [vmem:[%s5 + $0xc] sm:$0xf]
  %v363 = vld [vmem:[%s6] sm:$0x1]
  %v365 = vperm.slane %v363, 0
  %v371 = vunpack.c.l.b16 %v359
  %v372 = vunpack.c.l.b16 %v360
  %v373 = vunpack.c.l.b16 %v361
  %v374 = vunpack.c.l.b16 %v362
  %v375 = vpack.c.b16 %v372, %v371
  %v376 = vpack.c.b16 %v374, %v373
  %vm379 = vcmask 261120
  %v381 = vsel %vm379, %v358, 0
  %383 = vmatpush.bf16.msra.mxu0 0
  %384 = vmatpush.bf16.msra.mxu0 0
  %385 = vmatpush.bf16.msra.mxu0 0
  %386 = vmatpush.bf16.msra.mxu0 0
  %387 = vmatpush.bf16.msra.mxu0 0
  %388 = vmatpush.bf16.msra.mxu0 0
  %389 = vmatpush.bf16.msra.mxu0 %v376
  %390 = vmatpush.bf16.msra.mxu0 %v375
  %391 = vmatmul.bf16.gmra.mxu0 %v381
  %v392 = vpop.f32.mrf.mxu0
  %v393 = vadd.f32 %v365, %v392
  %v394 = vpop.f32.mrf.mxu0
  %395 = vdwg.mxu0
  %vm396 = vcmask 64512
  %397 = vst.msk [vmem:[%s7] sm:$0xff] %vm396, %v393
  // Predicated region
  $region30: #{bag_of_words_forward.1} parent=0 // pred_check
    _
  $region31: #{bag_of_words_forward.1} parent=0 // pred_check_branch
    %399 = sbr.rel (0) target = $region33
  $region32: #{bag_of_words_forward.1} parent=0 // pred_region
    _
  $region33: #{bag_of_words_forward.1} parent=0 // pred_fallthru
    _
  // Predicated region
  $region34: #{bag_of_words_forward.1} parent=0 // pred_check
    _
  $region35: #{bag_of_words_forward.1} parent=0 // pred_check_branch
    %401 = sbr.rel (0) target = $region37
  $region36: #{bag_of_words_forward.1} parent=0 // pred_region
    _
  $region37: #{bag_of_words_forward.1} parent=0 // pred_fallthru
    _

</llo_original>
